<compile_context>
chip_gen: v5e
topology: v5e:2x2
jax: 0.10.0
libtpu: 0.0.40
codegen_flags: <defaults>
</compile_context>

<pallas_src>
import functools

import jax
import jax.numpy as jnp
from jax import lax
from jax.experimental import pallas as pl
from jax.experimental.pallas import tpu as pltpu


def _decoder_lstm_kernel(x_ref, h0_ref, c0_ref, wih_ref, whh_ref, b_ref,
                         wout_ref, bout_ref,
                         y_ref, hT_ref, cT_ref,
                         gx_sc, hs_sc, *, seq_len, batch, hidden_size):
    """Whole sequence in one invocation.

    x_ref   : (T*B, I)      flattened input sequence
    h0/c0   : (B, H)        initial state
    wih_ref : (I, 4H)       W_ih^T
    whh_ref : (H, 4H)       W_hh^T
    b_ref   : (1, 4H)       b_ih + b_hh
    wout_ref: (H, O)        W_out^T
    bout_ref: (1, O)        b_out
    y_ref   : (T*B, O)      output head result
    hT/cT   : (B, H)        final state
    gx_sc   : (T*B, 4H)     VMEM scratch: input projection for all timesteps
    hs_sc   : (T*B, H)      VMEM scratch: h_t history for the output head
    """
    T, B, H = seq_len, batch, hidden_size

    # (1) Hoisted input projection for ALL timesteps: one MXU call, bias folded in.
    gx_sc[...] = (jnp.dot(x_ref[...], wih_ref[...],
                          preferred_element_type=jnp.float32)
                  + b_ref[...])

    whh = whh_ref[...]  # keep W_hh^T resident in vregs across the recurrence

    # (2) Serial recurrence. T is small and static -> fully unrolled for LLO visibility.
    def step(t, carry):
        h, c = carry
        row = t * B
        gates = gx_sc[pl.ds(row, B), :] + jnp.dot(
            h, whh, preferred_element_type=jnp.float32)          # (B, 4H)
        i = jax.nn.sigmoid(gates[:, 0 * H:1 * H])
        f = jax.nn.sigmoid(gates[:, 1 * H:2 * H])
        g = jnp.tanh(gates[:, 2 * H:3 * H])
        o = jax.nn.sigmoid(gates[:, 3 * H:4 * H])
        c_new = f * c + i * g
        h_new = o * jnp.tanh(c_new)
        hs_sc[pl.ds(row, B), :] = h_new                          # off the dependency chain
        return h_new, c_new

    h_fin, c_fin = lax.fori_loop(0, T, step, (h0_ref[...], c0_ref[...]),
                                 unroll=True)

    # (3) Final-state writes happen exactly once.
    hT_ref[...] = h_fin
    cT_ref[...] = c_fin

    # (4) Output head hoisted out of the recurrence: one matmul + one coalesced store.
    y_ref[...] = (jnp.dot(hs_sc[...], wout_ref[...],
                          preferred_element_type=jnp.float32)
                  + bout_ref[...])


def decoder_lstm_pallas(x, hidden, params):
    """Pallas forward of DecoderLSTM.

    x:      (T, B, I) float32
    hidden: (h0, c0), each (1, B, H)
    params: dict with w_ih (4H,I), w_hh (4H,H), b_ih (4H,), b_hh (4H,),
                      w_out (O,H), b_out (O,)
    Returns (output, (h_T, c_T)) matching the torch module:
      output = out(lstm_output).squeeze().unsqueeze(0)
    """
    T, B, I = x.shape
    h0, c0 = hidden
    H = h0.shape[-1]
    O = params["w_out"].shape[0]

    x2 = x.reshape(T * B, I)
    h0_2 = h0.reshape(B, H)
    c0_2 = c0.reshape(B, H)
    wih_t = params["w_ih"].T                          # (I, 4H)
    whh_t = params["w_hh"].T                          # (H, 4H)
    b = (params["b_ih"] + params["b_hh"]).reshape(1, 4 * H)
    wout_t = params["w_out"].T                        # (H, O)
    bout = params["b_out"].reshape(1, O)

    kernel = functools.partial(_decoder_lstm_kernel,
                               seq_len=T, batch=B, hidden_size=H)

    vmem = pl.BlockSpec(memory_space=pltpu.MemorySpace.VMEM)

    y2, hT, cT = pl.pallas_call(
        kernel,
        out_shape=(
            jax.ShapeDtypeStruct((T * B, O), jnp.float32),
            jax.ShapeDtypeStruct((B, H), jnp.float32),
            jax.ShapeDtypeStruct((B, H), jnp.float32),
        ),
        in_specs=[vmem] * 8,
        out_specs=(vmem, vmem, vmem),
        scratch_shapes=[
            pltpu.VMEM((T * B, 4 * H), jnp.float32),   # gates_x for all timesteps
            pltpu.VMEM((T * B, H), jnp.float32),       # h_t history for the output head
        ],
    )(x2, h0_2, c0_2, wih_t, whh_t, b, wout_t, bout)

    # Glue identical to torch: output = output.squeeze(); return output.unsqueeze(0)
    y = y2.reshape(T, B, O)
    out = jnp.expand_dims(jnp.squeeze(y), 0)
    return out, (hT[None], cT[None])


def decoder_lstm_ref(x, hidden, params):
    """Pure-JAX reference (same math as PyTorch nn.LSTM + nn.Linear)."""
    h0, c0 = hidden
    H = h0.shape[-1]
    w_ih, w_hh = params["w_ih"], params["w_hh"]
    b = params["b_ih"] + params["b_hh"]

    def step(carry, x_t):
        h, c = carry
        gates = x_t @ w_ih.T + h @ w_hh.T + b
        i = jax.nn.sigmoid(gates[:, 0 * H:1 * H])
        f = jax.nn.sigmoid(gates[:, 1 * H:2 * H])
        g = jnp.tanh(gates[:, 2 * H:3 * H])
        o = jax.nn.sigmoid(gates[:, 3 * H:4 * H])
        c_new = f * c + i * g
        h_new = o * jnp.tanh(c_new)
        return (h_new, c_new), h_new

    (hT, cT), hs = lax.scan(step, (h0[0], c0[0]), x)
    y = hs @ params["w_out"].T + params["b_out"]
    out = jnp.expand_dims(jnp.squeeze(y), 0)
    return out, (hT[None], cT[None])


def init_params(key, input_size, hidden_size, output_size):
    """Deterministic init mirroring PyTorch's uniform(-1/sqrt(H), 1/sqrt(H))."""
    ks = jax.random.split(key, 6)
    k = 1.0 / jnp.sqrt(jnp.float32(hidden_size))
    u = lambda kk, shape: jax.random.uniform(kk, shape, jnp.float32, -k, k)
    return {
        "w_ih": u(ks[0], (4 * hidden_size, input_size)),
        "w_hh": u(ks[1], (4 * hidden_size, hidden_size)),
        "b_ih": u(ks[2], (4 * hidden_size,)),
        "b_hh": u(ks[3], (4 * hidden_size,)),
        "w_out": u(ks[4], (output_size, hidden_size)),
        "b_out": u(ks[5], (output_size,)),
    }


if __name__ == "__main__":
    T, B = 8, 2                     # seq_len, batch
    input_size, hidden_size, output_size = 16, 32, 16

    key = jax.random.PRNGKey(0)
    kp, kx, kh, kc = jax.random.split(key, 4)
    params = init_params(kp, input_size, hidden_size, output_size)

    x = jax.random.normal(kx, (T, B, input_size), jnp.float32)
    h0 = jax.random.normal(kh, (1, B, hidden_size), jnp.float32)
    c0 = jax.random.normal(kc, (1, B, hidden_size), jnp.float32)

    out, (hT, cT) = decoder_lstm_pallas(x, (h0, c0), params)
    jax.block_until_ready((out, hT, cT))

    out_r, (hT_r, cT_r) = decoder_lstm_ref(x, (h0, c0), params)
    assert out.shape == out_r.shape == (1, T, B, output_size)
    assert jnp.max(jnp.abs(out - out_r)) < 1e-4
    assert jnp.max(jnp.abs(hT - hT_r)) < 1e-4
    assert jnp.max(jnp.abs(cT - cT_r)) < 1e-4

    print("KERNEL_OK")
</pallas_src>

<mosaic_0001>
module attributes {stable_mosaic.version = 11 : i64} {
  func.func @_decoder_lstm_kernel(%arg0: memref<16x16xf32, #tpu.memory_space<vmem>>, %arg1: memref<2x32xf32, #tpu.memory_space<vmem>>, %arg2: memref<2x32xf32, #tpu.memory_space<vmem>>, %arg3: memref<16x128xf32, #tpu.memory_space<vmem>>, %arg4: memref<32x128xf32, #tpu.memory_space<vmem>>, %arg5: memref<1x128xf32, #tpu.memory_space<vmem>>, %arg6: memref<32x16xf32, #tpu.memory_space<vmem>>, %arg7: memref<1x16xf32, #tpu.memory_space<vmem>>, %arg8: memref<16x16xf32, #tpu.memory_space<vmem>>, %arg9: memref<2x32xf32, #tpu.memory_space<vmem>>, %arg10: memref<2x32xf32, #tpu.memory_space<vmem>>, %arg11: memref<16x128xf32, #tpu.memory_space<vmem>>, %arg12: memref<16x32xf32, #tpu.memory_space<vmem>>) attributes {dimension_semantics = [], scalar_prefetch = 0 : i64, scratch_operands = 2 : i64, tpu.core_type = #tpu.core_type<tc>} {
    %c0 = arith.constant 0 : index
    %c0_0 = arith.constant 0 : index
    %0 = vector.load %arg0[%c0, %c0_0] : memref<16x16xf32, #tpu.memory_space<vmem>>, vector<16x16xf32>
    %c0_1 = arith.constant 0 : index
    %c0_2 = arith.constant 0 : index
    %1 = vector.load %arg3[%c0_1, %c0_2] : memref<16x128xf32, #tpu.memory_space<vmem>>, vector<16x128xf32>
    %cst = arith.constant dense<0.000000e+00> : vector<16x128xf32>
    %2 = tpu.matmul %0, %1, %cst {dimension_numbers = #tpu.dot_dimension_numbers<[1], [0], [0], [1], [0, 0, 1, 1], [], []>} : vector<16x16xf32>, vector<16x128xf32>, vector<16x128xf32> -> vector<16x128xf32>
    %c0_3 = arith.constant 0 : index
    %c0_4 = arith.constant 0 : index
    %3 = vector.load %arg5[%c0_3, %c0_4] : memref<1x128xf32, #tpu.memory_space<vmem>>, vector<1x128xf32>
    %4 = vector.broadcast %3 : vector<1x128xf32> to vector<16x128xf32>
    %5 = arith.addf %2, %4 : vector<16x128xf32>
    %c0_5 = arith.constant 0 : index
    %c0_6 = arith.constant 0 : index
    %6 = vector.load %arg11[%c0_5, %c0_6] : memref<16x128xf32, #tpu.memory_space<vmem>>, vector<16x128xf32>
    tpu.vector_store %arg11[%c0_5, %c0_6], %5 {strides = array<i32>} : memref<16x128xf32, #tpu.memory_space<vmem>>, vector<16x128xf32>,
    %c0_7 = arith.constant 0 : index
    %c0_8 = arith.constant 0 : index
    %7 = vector.load %arg4[%c0_7, %c0_8] : memref<32x128xf32, #tpu.memory_space<vmem>>, vector<32x128xf32>
    %c0_9 = arith.constant 0 : index
    %c0_10 = arith.constant 0 : index
    %8 = vector.load %arg1[%c0_9, %c0_10] : memref<2x32xf32, #tpu.memory_space<vmem>>, vector<2x32xf32>
    %c0_11 = arith.constant 0 : index
    %c0_12 = arith.constant 0 : index
    %9 = vector.load %arg2[%c0_11, %c0_12] : memref<2x32xf32, #tpu.memory_space<vmem>>, vector<2x32xf32>
    %c0_i32 = arith.constant 0 : i32
    %c2_i32 = arith.constant 2 : i32
    %10 = arith.muli %c0_i32, %c2_i32 : i32
    %11 = arith.index_cast %10 : i32 to index
    %c0_13 = arith.constant 0 : index
    %12 = vector.load %arg11[%11, %c0_13] : memref<16x128xf32, #tpu.memory_space<vmem>>, vector<2x128xf32>
    %cst_14 = arith.constant dense<0.000000e+00> : vector<2x128xf32>
    %13 = tpu.matmul %8, %7, %cst_14 {dimension_numbers = #tpu.dot_dimension_numbers<[1], [0], [0], [1], [0, 0, 1, 1], [], []>} : vector<2x32xf32>, vector<32x128xf32>, vector<2x128xf32> -> vector<2x128xf32>
    %14 = arith.addf %12, %13 : vector<2x128xf32>
    %15 = vector.extract_strided_slice %14 {offsets = [0, 0], sizes = [2, 32], strides = [1, 1]} : vector<2x128xf32> to vector<2x32xf32>
    %16 = arith.negf %15 : vector<2x32xf32>
    %17 = math.exp %16 : vector<2x32xf32>
    %cst_15 = arith.constant 1.000000e+00 : f32
    %18 = vector.broadcast %cst_15 : f32 to vector<2x32xf32>
    %19 = arith.addf %18, %17 : vector<2x32xf32>
    %20 = arith.divf %18, %19 : vector<2x32xf32>
    %21 = vector.extract_strided_slice %14 {offsets = [0, 32], sizes = [2, 32], strides = [1, 1]} : vector<2x128xf32> to vector<2x32xf32>
    %22 = arith.negf %21 : vector<2x32xf32>
    %23 = math.exp %22 : vector<2x32xf32>
    %cst_16 = arith.constant 1.000000e+00 : f32
    %24 = vector.broadcast %cst_16 : f32 to vector<2x32xf32>
    %25 = arith.addf %24, %23 : vector<2x32xf32>
    %26 = arith.divf %24, %25 : vector<2x32xf32>
    %27 = vector.extract_strided_slice %14 {offsets = [0, 64], sizes = [2, 32], strides = [1, 1]} : vector<2x128xf32> to vector<2x32xf32>
    %28 = math.tanh %27 : vector<2x32xf32>
    %29 = vector.extract_strided_slice %14 {offsets = [0, 96], sizes = [2, 32], strides = [1, 1]} : vector<2x128xf32> to vector<2x32xf32>
    %30 = arith.negf %29 : vector<2x32xf32>
    %31 = math.exp %30 : vector<2x32xf32>
    %cst_17 = arith.constant 1.000000e+00 : f32
    %32 = vector.broadcast %cst_17 : f32 to vector<2x32xf32>
    %33 = arith.addf %32, %31 : vector<2x32xf32>
    %34 = arith.divf %32, %33 : vector<2x32xf32>
    %35 = arith.mulf %26, %9 : vector<2x32xf32>
    %36 = arith.mulf %20, %28 : vector<2x32xf32>
    %37 = arith.addf %35, %36 : vector<2x32xf32>
    %38 = math.tanh %37 : vector<2x32xf32>
    %39 = arith.mulf %34, %38 : vector<2x32xf32>
    %40 = arith.index_cast %10 : i32 to index
    %c0_18 = arith.constant 0 : index
    %41 = vector.load %arg12[%40, %c0_18] : memref<16x32xf32, #tpu.memory_space<vmem>>, vector<2x32xf32>
    tpu.vector_store %arg12[%40, %c0_18], %39 {strides = array<i32>} : memref<16x32xf32, #tpu.memory_space<vmem>>, vector<2x32xf32>,
    %c1_i32 = arith.constant 1 : i32
    %c2_i32_19 = arith.constant 2 : i32
    %42 = arith.muli %c1_i32, %c2_i32_19 : i32
    %43 = arith.index_cast %42 : i32 to index
    %c0_20 = arith.constant 0 : index
    %44 = vector.load %arg11[%43, %c0_20] : memref<16x128xf32, #tpu.memory_space<vmem>>, vector<2x128xf32>
    %cst_21 = arith.constant dense<0.000000e+00> : vector<2x128xf32>
    %45 = tpu.matmul %39, %7, %cst_21 {dimension_numbers = #tpu.dot_dimension_numbers<[1], [0], [0], [1], [0, 0, 1, 1], [], []>} : vector<2x32xf32>, vector<32x128xf32>, vector<2x128xf32> -> vector<2x128xf32>
    %46 = arith.addf %44, %45 : vector<2x128xf32>
    %47 = vector.extract_strided_slice %46 {offsets = [0, 0], sizes = [2, 32], strides = [1, 1]} : vector<2x128xf32> to vector<2x32xf32>
    %48 = arith.negf %47 : vector<2x32xf32>
    %49 = math.exp %48 : vector<2x32xf32>
    %cst_22 = arith.constant 1.000000e+00 : f32
    %50 = vector.broadcast %cst_22 : f32 to vector<2x32xf32>
    %51 = arith.addf %50, %49 : vector<2x32xf32>
    %52 = arith.divf %50, %51 : vector<2x32xf32>
    %53 = vector.extract_strided_slice %46 {offsets = [0, 32], sizes = [2, 32], strides = [1, 1]} : vector<2x128xf32> to vector<2x32xf32>
    %54 = arith.negf %53 : vector<2x32xf32>
    %55 = math.exp %54 : vector<2x32xf32>
    %cst_23 = arith.constant 1.000000e+00 : f32
    %56 = vector.broadcast %cst_23 : f32 to vector<2x32xf32>
    %57 = arith.addf %56, %55 : vector<2x32xf32>
    %58 = arith.divf %56, %57 : vector<2x32xf32>
    %59 = vector.extract_strided_slice %46 {offsets = [0, 64], sizes = [2, 32], strides = [1, 1]} : vector<2x128xf32> to vector<2x32xf32>
    %60 = math.tanh %59 : vector<2x32xf32>
    %61 = vector.extract_strided_slice %46 {offsets = [0, 96], sizes = [2, 32], strides = [1, 1]} : vector<2x128xf32> to vector<2x32xf32>
    %62 = arith.negf %61 : vector<2x32xf32>
    %63 = math.exp %62 : vector<2x32xf32>
    %cst_24 = arith.constant 1.000000e+00 : f32
    %64 = vector.broadcast %cst_24 : f32 to vector<2x32xf32>
    %65 = arith.addf %64, %63 : vector<2x32xf32>
    %66 = arith.divf %64, %65 : vector<2x32xf32>
    %67 = arith.mulf %58, %37 : vector<2x32xf32>
    %68 = arith.mulf %52, %60 : vector<2x32xf32>
    %69 = arith.addf %67, %68 : vector<2x32xf32>
    %70 = math.tanh %69 : vector<2x32xf32>
    %71 = arith.mulf %66, %70 : vector<2x32xf32>
    %72 = arith.index_cast %42 : i32 to index
    %c0_25 = arith.constant 0 : index
    %73 = vector.load %arg12[%72, %c0_25] : memref<16x32xf32, #tpu.memory_space<vmem>>, vector<2x32xf32>
    tpu.vector_store %arg12[%72, %c0_25], %71 {strides = array<i32>} : memref<16x32xf32, #tpu.memory_space<vmem>>, vector<2x32xf32>,
    %c2_i32_26 = arith.constant 2 : i32
    %c2_i32_27 = arith.constant 2 : i32
    %74 = arith.muli %c2_i32_26, %c2_i32_27 : i32
    %75 = arith.index_cast %74 : i32 to index
    %c0_28 = arith.constant 0 : index
    %76 = vector.load %arg11[%75, %c0_28] : memref<16x128xf32, #tpu.memory_space<vmem>>, vector<2x128xf32>
    %cst_29 = arith.constant dense<0.000000e+00> : vector<2x128xf32>
    %77 = tpu.matmul %71, %7, %cst_29 {dimension_numbers = #tpu.dot_dimension_numbers<[1], [0], [0], [1], [0, 0, 1, 1], [], []>} : vector<2x32xf32>, vector<32x128xf32>, vector<2x128xf32> -> vector<2x128xf32>
    %78 = arith.addf %76, %77 : vector<2x128xf32>
    %79 = vector.extract_strided_slice %78 {offsets = [0, 0], sizes = [2, 32], strides = [1, 1]} : vector<2x128xf32> to vector<2x32xf32>
    %80 = arith.negf %79 : vector<2x32xf32>
    %81 = math.exp %80 : vector<2x32xf32>
    %cst_30 = arith.constant 1.000000e+00 : f32
    %82 = vector.broadcast %cst_30 : f32 to vector<2x32xf32>
    %83 = arith.addf %82, %81 : vector<2x32xf32>
    %84 = arith.divf %82, %83 : vector<2x32xf32>
    %85 = vector.extract_strided_slice %78 {offsets = [0, 32], sizes = [2, 32], strides = [1, 1]} : vector<2x128xf32> to vector<2x32xf32>
    %86 = arith.negf %85 : vector<2x32xf32>
    %87 = math.exp %86 : vector<2x32xf32>
    %cst_31 = arith.constant 1.000000e+00 : f32
    %88 = vector.broadcast %cst_31 : f32 to vector<2x32xf32>
    %89 = arith.addf %88, %87 : vector<2x32xf32>
    %90 = arith.divf %88, %89 : vector<2x32xf32>
    %91 = vector.extract_strided_slice %78 {offsets = [0, 64], sizes = [2, 32], strides = [1, 1]} : vector<2x128xf32> to vector<2x32xf32>
    %92 = math.tanh %91 : vector<2x32xf32>
    %93 = vector.extract_strided_slice %78 {offsets = [0, 96], sizes = [2, 32], strides = [1, 1]} : vector<2x128xf32> to vector<2x32xf32>
    %94 = arith.negf %93 : vector<2x32xf32>
    %95 = math.exp %94 : vector<2x32xf32>
    %cst_32 = arith.constant 1.000000e+00 : f32
    %96 = vector.broadcast %cst_32 : f32 to vector<2x32xf32>
    %97 = arith.addf %96, %95 : vector<2x32xf32>
    %98 = arith.divf %96, %97 : vector<2x32xf32>
    %99 = arith.mulf %90, %69 : vector<2x32xf32>
    %100 = arith.mulf %84, %92 : vector<2x32xf32>
    %101 = arith.addf %99, %100 : vector<2x32xf32>
    %102 = math.tanh %101 : vector<2x32xf32>
    %103 = arith.mulf %98, %102 : vector<2x32xf32>
    %104 = arith.index_cast %74 : i32 to index
    %c0_33 = arith.constant 0 : index
    %105 = vector.load %arg12[%104, %c0_33] : memref<16x32xf32, #tpu.memory_space<vmem>>, vector<2x32xf32>
    tpu.vector_store %arg12[%104, %c0_33], %103 {strides = array<i32>} : memref<16x32xf32, #tpu.memory_space<vmem>>, vector<2x32xf32>,
    %c3_i32 = arith.constant 3 : i32
    %c2_i32_34 = arith.constant 2 : i32
    %106 = arith.muli %c3_i32, %c2_i32_34 : i32
    %107 = arith.index_cast %106 : i32 to index
    %c0_35 = arith.constant 0 : index
    %108 = vector.load %arg11[%107, %c0_35] : memref<16x128xf32, #tpu.memory_space<vmem>>, vector<2x128xf32>
    %cst_36 = arith.constant dense<0.000000e+00> : vector<2x128xf32>
    %109 = tpu.matmul %103, %7, %cst_36 {dimension_numbers = #tpu.dot_dimension_numbers<[1], [0], [0], [1], [0, 0, 1, 1], [], []>} : vector<2x32xf32>, vector<32x128xf32>, vector<2x128xf32> -> vector<2x128xf32>
    %110 = arith.addf %108, %109 : vector<2x128xf32>
    %111 = vector.extract_strided_slice %110 {offsets = [0, 0], sizes = [2, 32], strides = [1, 1]} : vector<2x128xf32> to vector<2x32xf32>
    %112 = arith.negf %111 : vector<2x32xf32>
    %113 = math.exp %112 : vector<2x32xf32>
    %cst_37 = arith.constant 1.000000e+00 : f32
    %114 = vector.broadcast %cst_37 : f32 to vector<2x32xf32>
    %115 = arith.addf %114, %113 : vector<2x32xf32>
    %116 = arith.divf %114, %115 : vector<2x32xf32>
    %117 = vector.extract_strided_slice %110 {offsets = [0, 32], sizes = [2, 32], strides = [1, 1]} : vector<2x128xf32> to vector<2x32xf32>
    %118 = arith.negf %117 : vector<2x32xf32>
    %119 = math.exp %118 : vector<2x32xf32>
    %cst_38 = arith.constant 1.000000e+00 : f32
    %120 = vector.broadcast %cst_38 : f32 to vector<2x32xf32>
    %121 = arith.addf %120, %119 : vector<2x32xf32>
    %122 = arith.divf %120, %121 : vector<2x32xf32>
    %123 = vector.extract_strided_slice %110 {offsets = [0, 64], sizes = [2, 32], strides = [1, 1]} : vector<2x128xf32> to vector<2x32xf32>
    %124 = math.tanh %123 : vector<2x32xf32>
    %125 = vector.extract_strided_slice %110 {offsets = [0, 96], sizes = [2, 32], strides = [1, 1]} : vector<2x128xf32> to vector<2x32xf32>
    %126 = arith.negf %125 : vector<2x32xf32>
    %127 = math.exp %126 : vector<2x32xf32>
    %cst_39 = arith.constant 1.000000e+00 : f32
    %128 = vector.broadcast %cst_39 : f32 to vector<2x32xf32>
    %129 = arith.addf %128, %127 : vector<2x32xf32>
    %130 = arith.divf %128, %129 : vector<2x32xf32>
    %131 = arith.mulf %122, %101 : vector<2x32xf32>
    %132 = arith.mulf %116, %124 : vector<2x32xf32>
    %133 = arith.addf %131, %132 : vector<2x32xf32>
    %134 = math.tanh %133 : vector<2x32xf32>
    %135 = arith.mulf %130, %134 : vector<2x32xf32>
    %136 = arith.index_cast %106 : i32 to index
    %c0_40 = arith.constant 0 : index
    %137 = vector.load %arg12[%136, %c0_40] : memref<16x32xf32, #tpu.memory_space<vmem>>, vector<2x32xf32>
    tpu.vector_store %arg12[%136, %c0_40], %135 {strides = array<i32>} : memref<16x32xf32, #tpu.memory_space<vmem>>, vector<2x32xf32>,
    %c4_i32 = arith.constant 4 : i32
    %c2_i32_41 = arith.constant 2 : i32
    %138 = arith.muli %c4_i32, %c2_i32_41 : i32
    %139 = arith.index_cast %138 : i32 to index
    %c0_42 = arith.constant 0 : index
    %140 = vector.load %arg11[%139, %c0_42] : memref<16x128xf32, #tpu.memory_space<vmem>>, vector<2x128xf32>
    %cst_43 = arith.constant dense<0.000000e+00> : vector<2x128xf32>
    %141 = tpu.matmul %135, %7, %cst_43 {dimension_numbers = #tpu.dot_dimension_numbers<[1], [0], [0], [1], [0, 0, 1, 1], [], []>} : vector<2x32xf32>, vector<32x128xf32>, vector<2x128xf32> -> vector<2x128xf32>
    %142 = arith.addf %140, %141 : vector<2x128xf32>
    %143 = vector.extract_strided_slice %142 {offsets = [0, 0], sizes = [2, 32], strides = [1, 1]} : vector<2x128xf32> to vector<2x32xf32>
    %144 = arith.negf %143 : vector<2x32xf32>
    %145 = math.exp %144 : vector<2x32xf32>
    %cst_44 = arith.constant 1.000000e+00 : f32
    %146 = vector.broadcast %cst_44 : f32 to vector<2x32xf32>
    %147 = arith.addf %146, %145 : vector<2x32xf32>
    %148 = arith.divf %146, %147 : vector<2x32xf32>
    %149 = vector.extract_strided_slice %142 {offsets = [0, 32], sizes = [2, 32], strides = [1, 1]} : vector<2x128xf32> to vector<2x32xf32>
    %150 = arith.negf %149 : vector<2x32xf32>
    %151 = math.exp %150 : vector<2x32xf32>
    %cst_45 = arith.constant 1.000000e+00 : f32
    %152 = vector.broadcast %cst_45 : f32 to vector<2x32xf32>
    %153 = arith.addf %152, %151 : vector<2x32xf32>
    %154 = arith.divf %152, %153 : vector<2x32xf32>
    %155 = vector.extract_strided_slice %142 {offsets = [0, 64], sizes = [2, 32], strides = [1, 1]} : vector<2x128xf32> to vector<2x32xf32>
    %156 = math.tanh %155 : vector<2x32xf32>
    %157 = vector.extract_strided_slice %142 {offsets = [0, 96], sizes = [2, 32], strides = [1, 1]} : vector<2x128xf32> to vector<2x32xf32>
    %158 = arith.negf %157 : vector<2x32xf32>
    %159 = math.exp %158 : vector<2x32xf32>
    %cst_46 = arith.constant 1.000000e+00 : f32
    %160 = vector.broadcast %cst_46 : f32 to vector<2x32xf32>
    %161 = arith.addf %160, %159 : vector<2x32xf32>
    %162 = arith.divf %160, %161 : vector<2x32xf32>
    %163 = arith.mulf %154, %133 : vector<2x32xf32>
    %164 = arith.mulf %148, %156 : vector<2x32xf32>
    %165 = arith.addf %163, %164 : vector<2x32xf32>
    %166 = math.tanh %165 : vector<2x32xf32>
    %167 = arith.mulf %162, %166 : vector<2x32xf32>
    %168 = arith.index_cast %138 : i32 to index
    %c0_47 = arith.constant 0 : index
    %169 = vector.load %arg12[%168, %c0_47] : memref<16x32xf32, #tpu.memory_space<vmem>>, vector<2x32xf32>
    tpu.vector_store %arg12[%168, %c0_47], %167 {strides = array<i32>} : memref<16x32xf32, #tpu.memory_space<vmem>>, vector<2x32xf32>,
    %c5_i32 = arith.constant 5 : i32
    %c2_i32_48 = arith.constant 2 : i32
    %170 = arith.muli %c5_i32, %c2_i32_48 : i32
    %171 = arith.index_cast %170 : i32 to index
    %c0_49 = arith.constant 0 : index
    %172 = vector.load %arg11[%171, %c0_49] : memref<16x128xf32, #tpu.memory_space<vmem>>, vector<2x128xf32>
    %cst_50 = arith.constant dense<0.000000e+00> : vector<2x128xf32>
    %173 = tpu.matmul %167, %7, %cst_50 {dimension_numbers = #tpu.dot_dimension_numbers<[1], [0], [0], [1], [0, 0, 1, 1], [], []>} : vector<2x32xf32>, vector<32x128xf32>, vector<2x128xf32> -> vector<2x128xf32>
    %174 = arith.addf %172, %173 : vector<2x128xf32>
    %175 = vector.extract_strided_slice %174 {offsets = [0, 0], sizes = [2, 32], strides = [1, 1]} : vector<2x128xf32> to vector<2x32xf32>
    %176 = arith.negf %175 : vector<2x32xf32>
    %177 = math.exp %176 : vector<2x32xf32>
    %cst_51 = arith.constant 1.000000e+00 : f32
    %178 = vector.broadcast %cst_51 : f32 to vector<2x32xf32>
    %179 = arith.addf %178, %177 : vector<2x32xf32>
    %180 = arith.divf %178, %179 : vector<2x32xf32>
    %181 = vector.extract_strided_slice %174 {offsets = [0, 32], sizes = [2, 32], strides = [1, 1]} : vector<2x128xf32> to vector<2x32xf32>
    %182 = arith.negf %181 : vector<2x32xf32>
    %183 = math.exp %182 : vector<2x32xf32>
    %cst_52 = arith.constant 1.000000e+00 : f32
    %184 = vector.broadcast %cst_52 : f32 to vector<2x32xf32>
    %185 = arith.addf %184, %183 : vector<2x32xf32>
    %186 = arith.divf %184, %185 : vector<2x32xf32>
    %187 = vector.extract_strided_slice %174 {offsets = [0, 64], sizes = [2, 32], strides = [1, 1]} : vector<2x128xf32> to vector<2x32xf32>
    %188 = math.tanh %187 : vector<2x32xf32>
    %189 = vector.extract_strided_slice %174 {offsets = [0, 96], sizes = [2, 32], strides = [1, 1]} : vector<2x128xf32> to vector<2x32xf32>
    %190 = arith.negf %189 : vector<2x32xf32>
    %191 = math.exp %190 : vector<2x32xf32>
    %cst_53 = arith.constant 1.000000e+00 : f32
    %192 = vector.broadcast %cst_53 : f32 to vector<2x32xf32>
    %193 = arith.addf %192, %191 : vector<2x32xf32>
    %194 = arith.divf %192, %193 : vector<2x32xf32>
    %195 = arith.mulf %186, %165 : vector<2x32xf32>
    %196 = arith.mulf %180, %188 : vector<2x32xf32>
    %197 = arith.addf %195, %196 : vector<2x32xf32>
    %198 = math.tanh %197 : vector<2x32xf32>
    %199 = arith.mulf %194, %198 : vector<2x32xf32>
    %200 = arith.index_cast %170 : i32 to index
    %c0_54 = arith.constant 0 : index
    %201 = vector.load %arg12[%200, %c0_54] : memref<16x32xf32, #tpu.memory_space<vmem>>, vector<2x32xf32>
    tpu.vector_store %arg12[%200, %c0_54], %199 {strides = array<i32>} : memref<16x32xf32, #tpu.memory_space<vmem>>, vector<2x32xf32>,
    %c6_i32 = arith.constant 6 : i32
    %c2_i32_55 = arith.constant 2 : i32
    %202 = arith.muli %c6_i32, %c2_i32_55 : i32
    %203 = arith.index_cast %202 : i32 to index
    %c0_56 = arith.constant 0 : index
    %204 = vector.load %arg11[%203, %c0_56] : memref<16x128xf32, #tpu.memory_space<vmem>>, vector<2x128xf32>
    %cst_57 = arith.constant dense<0.000000e+00> : vector<2x128xf32>
    %205 = tpu.matmul %199, %7, %cst_57 {dimension_numbers = #tpu.dot_dimension_numbers<[1], [0], [0], [1], [0, 0, 1, 1], [], []>} : vector<2x32xf32>, vector<32x128xf32>, vector<2x128xf32> -> vector<2x128xf32>
    %206 = arith.addf %204, %205 : vector<2x128xf32>
    %207 = vector.extract_strided_slice %206 {offsets = [0, 0], sizes = [2, 32], strides = [1, 1]} : vector<2x128xf32> to vector<2x32xf32>
    %208 = arith.negf %207 : vector<2x32xf32>
    %209 = math.exp %208 : vector<2x32xf32>
    %cst_58 = arith.constant 1.000000e+00 : f32
    %210 = vector.broadcast %cst_58 : f32 to vector<2x32xf32>
    %211 = arith.addf %210, %209 : vector<2x32xf32>
    %212 = arith.divf %210, %211 : vector<2x32xf32>
    %213 = vector.extract_strided_slice %206 {offsets = [0, 32], sizes = [2, 32], strides = [1, 1]} : vector<2x128xf32> to vector<2x32xf32>
    %214 = arith.negf %213 : vector<2x32xf32>
    %215 = math.exp %214 : vector<2x32xf32>
    %cst_59 = arith.constant 1.000000e+00 : f32
    %216 = vector.broadcast %cst_59 : f32 to vector<2x32xf32>
    %217 = arith.addf %216, %215 : vector<2x32xf32>
    %218 = arith.divf %216, %217 : vector<2x32xf32>
    %219 = vector.extract_strided_slice %206 {offsets = [0, 64], sizes = [2, 32], strides = [1, 1]} : vector<2x128xf32> to vector<2x32xf32>
    %220 = math.tanh %219 : vector<2x32xf32>
    %221 = vector.extract_strided_slice %206 {offsets = [0, 96], sizes = [2, 32], strides = [1, 1]} : vector<2x128xf32> to vector<2x32xf32>
    %222 = arith.negf %221 : vector<2x32xf32>
    %223 = math.exp %222 : vector<2x32xf32>
    %cst_60 = arith.constant 1.000000e+00 : f32
    %224 = vector.broadcast %cst_60 : f32 to vector<2x32xf32>
    %225 = arith.addf %224, %223 : vector<2x32xf32>
    %226 = arith.divf %224, %225 : vector<2x32xf32>
    %227 = arith.mulf %218, %197 : vector<2x32xf32>
    %228 = arith.mulf %212, %220 : vector<2x32xf32>
    %229 = arith.addf %227, %228 : vector<2x32xf32>
    %230 = math.tanh %229 : vector<2x32xf32>
    %231 = arith.mulf %226, %230 : vector<2x32xf32>
    %232 = arith.index_cast %202 : i32 to index
    %c0_61 = arith.constant 0 : index
    %233 = vector.load %arg12[%232, %c0_61] : memref<16x32xf32, #tpu.memory_space<vmem>>, vector<2x32xf32>
    tpu.vector_store %arg12[%232, %c0_61], %231 {strides = array<i32>} : memref<16x32xf32, #tpu.memory_space<vmem>>, vector<2x32xf32>,
    %c7_i32 = arith.constant 7 : i32
    %c2_i32_62 = arith.constant 2 : i32
    %234 = arith.muli %c7_i32, %c2_i32_62 : i32
    %235 = arith.index_cast %234 : i32 to index
    %c0_63 = arith.constant 0 : index
    %236 = vector.load %arg11[%235, %c0_63] : memref<16x128xf32, #tpu.memory_space<vmem>>, vector<2x128xf32>
    %cst_64 = arith.constant dense<0.000000e+00> : vector<2x128xf32>
    %237 = tpu.matmul %231, %7, %cst_64 {dimension_numbers = #tpu.dot_dimension_numbers<[1], [0], [0], [1], [0, 0, 1, 1], [], []>} : vector<2x32xf32>, vector<32x128xf32>, vector<2x128xf32> -> vector<2x128xf32>
    %238 = arith.addf %236, %237 : vector<2x128xf32>
    %239 = vector.extract_strided_slice %238 {offsets = [0, 0], sizes = [2, 32], strides = [1, 1]} : vector<2x128xf32> to vector<2x32xf32>
    %240 = arith.negf %239 : vector<2x32xf32>
    %241 = math.exp %240 : vector<2x32xf32>
    %cst_65 = arith.constant 1.000000e+00 : f32
    %242 = vector.broadcast %cst_65 : f32 to vector<2x32xf32>
    %243 = arith.addf %242, %241 : vector<2x32xf32>
    %244 = arith.divf %242, %243 : vector<2x32xf32>
    %245 = vector.extract_strided_slice %238 {offsets = [0, 32], sizes = [2, 32], strides = [1, 1]} : vector<2x128xf32> to vector<2x32xf32>
    %246 = arith.negf %245 : vector<2x32xf32>
    %247 = math.exp %246 : vector<2x32xf32>
    %cst_66 = arith.constant 1.000000e+00 : f32
    %248 = vector.broadcast %cst_66 : f32 to vector<2x32xf32>
    %249 = arith.addf %248, %247 : vector<2x32xf32>
    %250 = arith.divf %248, %249 : vector<2x32xf32>
    %251 = vector.extract_strided_slice %238 {offsets = [0, 64], sizes = [2, 32], strides = [1, 1]} : vector<2x128xf32> to vector<2x32xf32>
    %252 = math.tanh %251 : vector<2x32xf32>
    %253 = vector.extract_strided_slice %238 {offsets = [0, 96], sizes = [2, 32], strides = [1, 1]} : vector<2x128xf32> to vector<2x32xf32>
    %254 = arith.negf %253 : vector<2x32xf32>
    %255 = math.exp %254 : vector<2x32xf32>
    %cst_67 = arith.constant 1.000000e+00 : f32
    %256 = vector.broadcast %cst_67 : f32 to vector<2x32xf32>
    %257 = arith.addf %256, %255 : vector<2x32xf32>
    %258 = arith.divf %256, %257 : vector<2x32xf32>
    %259 = arith.mulf %250, %229 : vector<2x32xf32>
    %260 = arith.mulf %244, %252 : vector<2x32xf32>
    %261 = arith.addf %259, %260 : vector<2x32xf32>
    %262 = math.tanh %261 : vector<2x32xf32>
    %263 = arith.mulf %258, %262 : vector<2x32xf32>
    %264 = arith.index_cast %234 : i32 to index
    %c0_68 = arith.constant 0 : index
    %265 = vector.load %arg12[%264, %c0_68] : memref<16x32xf32, #tpu.memory_space<vmem>>, vector<2x32xf32>
    tpu.vector_store %arg12[%264, %c0_68], %263 {strides = array<i32>} : memref<16x32xf32, #tpu.memory_space<vmem>>, vector<2x32xf32>,
    %c8_i32 = arith.constant 8 : i32
    %c0_69 = arith.constant 0 : index
    %c0_70 = arith.constant 0 : index
    %266 = vector.load %arg9[%c0_69, %c0_70] : memref<2x32xf32, #tpu.memory_space<vmem>>, vector<2x32xf32>
    tpu.vector_store %arg9[%c0_69, %c0_70], %263 {strides = array<i32>} : memref<2x32xf32, #tpu.memory_space<vmem>>, vector<2x32xf32>,
    %c0_71 = arith.constant 0 : index
    %c0_72 = arith.constant 0 : index
    %267 = vector.load %arg10[%c0_71, %c0_72] : memref<2x32xf32, #tpu.memory_space<vmem>>, vector<2x32xf32>
    tpu.vector_store %arg10[%c0_71, %c0_72], %261 {strides = array<i32>} : memref<2x32xf32, #tpu.memory_space<vmem>>, vector<2x32xf32>,
    %c0_73 = arith.constant 0 : index
    %c0_74 = arith.constant 0 : index
    %268 = vector.load %arg12[%c0_73, %c0_74] : memref<16x32xf32, #tpu.memory_space<vmem>>, vector<16x32xf32>
    %c0_75 = arith.constant 0 : index
    %c0_76 = arith.constant 0 : index
    %269 = vector.load %arg6[%c0_75, %c0_76] : memref<32x16xf32, #tpu.memory_space<vmem>>, vector<32x16xf32>
    %cst_77 = arith.constant dense<0.000000e+00> : vector<16x16xf32>
    %270 = tpu.matmul %268, %269, %cst_77 {dimension_numbers = #tpu.dot_dimension_numbers<[1], [0], [0], [1], [0, 0, 1, 1], [], []>} : vector<16x32xf32>, vector<32x16xf32>, vector<16x16xf32> -> vector<16x16xf32>
    %c0_78 = arith.constant 0 : index
    %c0_79 = arith.constant 0 : index
    %271 = vector.load %arg7[%c0_78, %c0_79] : memref<1x16xf32, #tpu.memory_space<vmem>>, vector<1x16xf32>
    %272 = vector.broadcast %271 : vector<1x16xf32> to vector<16x16xf32>
    %273 = arith.addf %270, %272 : vector<16x16xf32>
    %c0_80 = arith.constant 0 : index
    %c0_81 = arith.constant 0 : index
    %274 = vector.load %arg8[%c0_80, %c0_81] : memref<16x16xf32, #tpu.memory_space<vmem>>, vector<16x16xf32>
    tpu.vector_store %arg8[%c0_80, %c0_81], %273 {strides = array<i32>} : memref<16x16xf32, #tpu.memory_space<vmem>>, vector<16x16xf32>,
    return
  }
}

</mosaic_0001>

<llo_original>
// kernel: tpu_custom_call.1
$region0: #{tpu_custom_call.1}
  #allocation0 [shape = 'u32[]', space=smem, size = 0x4, offset = 0x4, fixed_abs, tag = 'smem constant byte address 0x4 - core index']
  #allocation1 [shape = 'u32[72,128]{1,0:T(1,128)}', space=vmem, size = 0x9000, scoped, tag = 'internal scratch']
  #allocation2 [shape = 'f32[16,128]{1,0:T(8,128)}', space=vmem, size = 0x2000, scoped, tag = 'scratch operand']
  #allocation3 [shape = 'f32[16,32]{1,0:T(8,128)}', space=vmem, size = 0x2000, scoped, tag = 'scratch operand']
  %s0 = inlined_call_operand.vmem [shape: f32[16,16], index: 0, kind: input, shape index: {}]
  %s1 = inlined_call_operand.vmem [shape: f32[2,32], index: 1, kind: input, shape index: {}]
  %s2 = inlined_call_operand.hbm [shape: f32[2,32], index: 2, kind: input, shape index: {}]
  %s3 = inlined_call_operand.hbm [shape: f32[16,128], index: 3, kind: input, shape index: {}]
  %s4 = inlined_call_operand.vmem [shape: f32[32,128], index: 4, kind: input, shape index: {}]
  %s5 = inlined_call_operand.vmem [shape: f32[1,128], index: 5, kind: input, shape index: {}]
  %s6 = inlined_call_operand.vmem [shape: f32[32,16], index: 6, kind: input, shape index: {}]
  %s7 = inlined_call_operand.vmem [shape: f32[1,16], index: 7, kind: input, shape index: {}]
  %s8 = inlined_call_operand.hbm [shape: f32[16,16], index: 8, kind: output, shape index: {0}]
  %s9 = inlined_call_operand.hbm [shape: f32[2,32], index: 9, kind: output, shape index: {1}]
  %s10 = inlined_call_operand.hbm [shape: f32[2,32], index: 10, kind: output, shape index: {2}]
  %11 = xla_tuple %s8, %s9, %s10
  %s12 = sld [smem:[#allocation0]]
  $region66: #{tpu_custom_call.1} parent=0
    _
  %s14 = ssub.s32 1, %s12
  %s15 = scalar_select 0, %s14, %s12
  $region1: #{tpu_custom_call.1} parent=0
    #allocation4 [shape = 'u8[1024]{0}', space=vmem, size = 0x400, scoped, tag = 'input window, operand 2, single buffered']
    #allocation5 [shape = 's32[1]{0}', space=sflag, size = 0x4, scoped, tag = 'scoped memory for tpu_custom_call.1']
    #allocation6 [shape = 's32[1]{0}', space=sflag, size = 0x4, scoped, tag = 'scoped memory for tpu_custom_call.1']
    #allocation7 [shape = 'u8[8192]{0}', space=vmem, size = 0x2000, scoped, tag = 'input window, operand 3, single buffered']
    #allocation8 [shape = 's32[1]{0}', space=sflag, size = 0x4, scoped, tag = 'scoped memory for tpu_custom_call.1']
    #allocation9 [shape = 'u8[8192]{0}', space=vmem, size = 0x2000, scoped, tag = 'output window, operand 0, single buffered']
    #allocation10 [shape = 'u8[1024]{0}', space=vmem, size = 0x400, scoped, tag = 'output window, operand 1, single buffered']
    #allocation11 [shape = 's32[1]{0}', space=sflag, size = 0x4, scoped, tag = 'scoped memory for tpu_custom_call.1']
    #allocation12 [shape = 'u8[1024]{0}', space=vmem, size = 0x400, scoped, tag = 'output window, operand 2, single buffered']
    %16 = vsyncpa [#allocation5], 0
    %17 = vsyncpa [#allocation8], 0
    %18 = vsyncpa [#allocation6], 0
    %19 = vsyncpa [#allocation11], 0
    // Predicated region
    $region2: #{tpu_custom_call.1} parent=1 // pred_check
      _
    $region3: #{tpu_custom_call.1} parent=1 // pred_check_branch
      %21 = sbr.rel (0) target = $region5
    $region4: #{tpu_custom_call.1} parent=1 // pred_region
      _
    $region5: #{tpu_custom_call.1} parent=1 // pred_fallthru
      _
    // Predicated region
    $region6: #{tpu_custom_call.1} parent=1 // pred_check
      _
    $region7: #{tpu_custom_call.1} parent=1 // pred_check_branch
      %23 = sbr.rel (0) target = $region9
    $region8: #{tpu_custom_call.1} parent=1 // pred_region
      _
    $region9: #{tpu_custom_call.1} parent=1 // pred_fallthru
      _
    // Predicated region
    $region10: #{tpu_custom_call.1} parent=1 // pred_check
      _
    $region11: #{tpu_custom_call.1} parent=1 // pred_check_branch
      %25 = sbr.rel (0) target = $region13
    $region12: #{tpu_custom_call.1} parent=1 // pred_region
      %27 = vsyncadd [#allocation5], 0
      %s29 = sshll.u32 %s2, 4
      %s30 = int_to_ptr.hbm [resolvable:$true] %s29
      %s31 = sshll.u32 [#allocation4], 4
      %s32 = int_to_ptr.vmem [resolvable:$true] %s31
      %34 = dma.hbm_to_vmem [thread:$0]  %s30, 32, %s32, [#allocation5]
    $region13: #{tpu_custom_call.1} parent=1 // pred_fallthru
      _
    // Predicated region
    $region14: #{tpu_custom_call.1} parent=1 // pred_check
      _
    $region15: #{tpu_custom_call.1} parent=1 // pred_check_branch
      %36 = sbr.rel (0) target = $region17
    $region16: #{tpu_custom_call.1} parent=1 // pred_region
      %38 = vsyncadd [#allocation8], 0
      %s39 = sshll.u32 %s3, 4
      %s40 = int_to_ptr.hbm [resolvable:$true] %s39
      %s41 = sshll.u32 [#allocation7], 4
      %s42 = int_to_ptr.vmem [resolvable:$true] %s41
      %47 = dma.hbm_to_vmem [thread:$0]  %s40, 256, %s42, [#allocation8], 128, 128, 8
    $region17: #{tpu_custom_call.1} parent=1 // pred_fallthru
      _
    // Predicated region
    $region18: #{tpu_custom_call.1} parent=1 // pred_check
      _
    $region19: #{tpu_custom_call.1} parent=1 // pred_check_branch
      %49 = sbr.rel (0) target = $region21
    $region20: #{tpu_custom_call.1} parent=1 // pred_region
      _
    $region21: #{tpu_custom_call.1} parent=1 // pred_fallthru
      _
    // Predicated region
    $region22: #{tpu_custom_call.1} parent=1 // pred_check
      _
    $region23: #{tpu_custom_call.1} parent=1 // pred_check_branch
      %51 = sbr.rel (0) target = $region25
    $region24: #{tpu_custom_call.1} parent=1 // pred_region
      _
    $region25: #{tpu_custom_call.1} parent=1 // pred_fallthru
      _
    // Predicated region
    $region26: #{tpu_custom_call.1} parent=1 // pred_check
      _
    $region27: #{tpu_custom_call.1} parent=1 // pred_check_branch
      %53 = sbr.rel (0) target = $region29
    $region28: #{tpu_custom_call.1} parent=1 // pred_region
      _
    $region29: #{tpu_custom_call.1} parent=1 // pred_fallthru
      _
    // Predicated region
    $region30: #{tpu_custom_call.1} parent=1 // pred_check
      _
    $region31: #{tpu_custom_call.1} parent=1 // pred_check_branch
      %55 = sbr.rel (0) target = $region33
    $region32: #{tpu_custom_call.1} parent=1 // pred_region
      _
    $region33: #{tpu_custom_call.1} parent=1 // pred_fallthru
      _
    // Predicated region
    $region34: #{tpu_custom_call.1} parent=1 // pred_check
      _
    $region35: #{tpu_custom_call.1} parent=1 // pred_check_branch
      %57 = sbr.rel (0) target = $region37
    $region36: #{tpu_custom_call.1} parent=1 // pred_region
      %59 = dma.done [#allocation5], 32
    $region37: #{tpu_custom_call.1} parent=1 // pred_fallthru
      _
    // Predicated region
    $region38: #{tpu_custom_call.1} parent=1 // pred_check
      _
    $region39: #{tpu_custom_call.1} parent=1 // pred_check_branch
      %61 = sbr.rel (0) target = $region41
    $region40: #{tpu_custom_call.1} parent=1 // pred_region
      %63 = dma.done [#allocation8], 256
    $region41: #{tpu_custom_call.1} parent=1 // pred_fallthru
      _
    %v64 = vld [vmem:[%s0] sm:$0xff]
    %v65 = vld [vmem:[%s0 + $0x8] sm:$0xff]
    %v66 = vld [vmem:[#allocation7] sm:$0xff]
    %v67 = vld [vmem:[#allocation7 + $0x8] sm:$0xff]
    %v68 = vld [vmem:[%s5] sm:$0x1]
    %v70 = vperm.slane %v68, 0
    %vm72 = vcmask 130048
    %v74 = vsel %vm72, %v64, 0
    %v77 = vsel %vm72, %v65, 0
    %79 = vmatpush.msra.mxu0 0.0
    %80 = vmatpush.msra.mxu0 0.0
    %81 = vmatpush.msra.mxu0 0.0
    %82 = vmatpush.msra.mxu0 0.0
    %83 = vmatpush.msra.mxu0 0.0
    %84 = vmatpush.msra.mxu0 0.0
    %85 = vmatpush.msra.mxu0 0.0
    %86 = vmatpush.msra.mxu0 0.0
    %87 = vmatpush.msra.mxu0 0.0
    %88 = vmatpush.msra.mxu0 0.0
    %89 = vmatpush.msra.mxu0 0.0
    %90 = vmatpush.msra.mxu0 0.0
    %91 = vmatpush.msra.mxu0 0.0
    %92 = vmatpush.msra.mxu0 0.0
    %93 = vmatpush.msra.mxu0 %v67
    %94 = vmatpush.msra.mxu0 %v66
    %95 = vmatmul.f32.gmra.mxu0 %v74
    %v96 = vpop.f32.mrf.mxu0
    %v97 = vadd.f32 %v70, %v96
    %98 = vmatmul.f32.gmra.mxu0 %v77
    %v99 = vpop.f32.mrf.mxu0
    %v100 = vadd.f32 %v70, %v99
    %101 = vdwg.mxu0
    %102 = vst [vmem:[#allocation2] sm:$0xff] %v97
    %103 = vst [vmem:[#allocation2 + $0x8] sm:$0xff] %v100
    %v104 = vld [vmem:[%s4] sm:$0xff]
    %v105 = vld [vmem:[%s4 + $0x8] sm:$0xff]
    %v106 = vld [vmem:[%s4 + $0x10] sm:$0xff]
    %v107 = vld [vmem:[%s4 + $0x18] sm:$0xff]
    %v108 = vld [vmem:[%s1] sm:$0x3]
    %v109 = vld [vmem:[#allocation4] sm:$0x3]
    %v110 = vld [vmem:[#allocation2] sm:$0x3]
    %vm111 = vcmask 261120
    %v113 = vsel %vm111, %v108, 0
    %115 = vmatpush.msra.mxu0 0.0
    %116 = vmatpush.msra.mxu0 0.0
    %117 = vmatpush.msra.mxu0 0.0
    %118 = vmatpush.msra.mxu0 0.0
    %119 = vmatpush.msra.mxu0 0.0
    %120 = vmatpush.msra.mxu0 0.0
    %121 = vmatpush.msra.mxu0 0.0
    %122 = vmatpush.msra.mxu0 0.0
    %123 = vmatpush.msra.mxu0 0.0
    %124 = vmatpush.msra.mxu0 0.0
    %125 = vmatpush.msra.mxu0 0.0
    %126 = vmatpush.msra.mxu0 0.0
    %127 = vmatpush.msra.mxu0 %v107
    %128 = vmatpush.msra.mxu0 %v106
    %129 = vmatpush.msra.mxu0 %v105
    %130 = vmatpush.msra.mxu0 %v104
    %131 = vmatmul.f32.gmra.mxu0 %v113
    %v132 = vpop.f32.mrf.mxu0
    %v133 = vadd.f32 0.0, %v132
    %134 = vdwg.mxu0
    %v135 = vadd.f32 %v110, %v133
    %v136 = vxor.u32 %v135, 2147483648
    %v137 = vmul.f32 %v136, 1.442695
    %v138 = vpow.pop %v137
    %v139 = vadd.f32 %v138, 1.0
    %v140 = vrcp.pop %v139
    %v141 = vmul.f32 %v139, %v140
    %v142 = vsub.f32 1.0, %v141
    %v143 = vmul.f32 %v140, %v142
    %v144 = vadd.f32 %v140, %v143
    %vm145 = vweird.f32 %v139
    %vm146 = vweird.f32 %v140
    %vm147 = vmor %vm145, %vm146
    %v148 = vsel %vm147, %v140, %v144
    %v149 = vand.u32 2147483647, %v139
    %vm150 = vcmp.eq.f32.partialorder %v149, 8.507059e+37
    %v151 = vand.u32 %v139, 2147483648
    %v152 = vor.u32 1.1754944e-38, %v151
    %v153 = vsel %vm150, %v152, %v148
    %v154 = vmul.f32 1.0, %v153
    %v155 = vtanh.pop %v135
    %157 = vrot.lane.b32.xlu0 %v109, 32
    %v158 = vpop.permute.xlu0 %157
    %v160 = vmul.f32 %v154, %v158
    %162 = vrot.lane.b32.xlu0 %v155, 64
    %v163 = vpop.permute.xlu0 %162
    %v165 = vmul.f32 %v154, %v163
    %167 = vrot.lane.b32.xlu0 %v165, 32
    %v168 = vpop.permute.xlu0 %167
    %v170 = vadd.f32 %v160, %v168
    %v171 = vtanh.pop %v170
    %173 = vrot.lane.b32.xlu0 %v171, 64
    %v174 = vpop.permute.xlu0 %173
    %v176 = vmul.f32 %v154, %v174
    %178 = vrot.lane.b32.xlu0 %v176, 32
    %v179 = vpop.permute.xlu0 %178
    %vm181 = vcmask 254976
    %182 = vst.msk [vmem:[#allocation3] sm:$0x3] %vm181, %v179
    %v183 = vld [vmem:[#allocation2 + $0x2] sm:$0x3]
    %v184 = vsel %vm111, %v179, 0
    %186 = vmatpush.msra.mxu0 0.0
    %187 = vmatpush.msra.mxu0 0.0
    %188 = vmatpush.msra.mxu0 0.0
    %189 = vmatpush.msra.mxu0 0.0
    %190 = vmatpush.msra.mxu0 0.0
    %191 = vmatpush.msra.mxu0 0.0
    %192 = vmatpush.msra.mxu0 0.0
    %193 = vmatpush.msra.mxu0 0.0
    %194 = vmatpush.msra.mxu0 0.0
    %195 = vmatpush.msra.mxu0 0.0
    %196 = vmatpush.msra.mxu0 0.0
    %197 = vmatpush.msra.mxu0 0.0
    %198 = vmatpush.msra.mxu0 %v107
    %199 = vmatpush.msra.mxu0 %v106
    %200 = vmatpush.msra.mxu0 %v105
    %201 = vmatpush.msra.mxu0 %v104
    %202 = vmatmul.f32.gmra.mxu0 %v184
    %v203 = vpop.f32.mrf.mxu0
    %v204 = vadd.f32 0.0, %v203
    %205 = vdwg.mxu0
    %v206 = vadd.f32 %v183, %v204
    %v207 = vxor.u32 %v206, 2147483648
    %v208 = vmul.f32 %v207, 1.442695
    %v209 = vpow.pop %v208
    %v210 = vadd.f32 %v209, 1.0
    %v211 = vrcp.pop %v210
    %v212 = vmul.f32 %v210, %v211
    %v213 = vsub.f32 1.0, %v212
    %v214 = vmul.f32 %v211, %v213
    %v215 = vadd.f32 %v211, %v214
    %vm216 = vweird.f32 %v210
    %vm217 = vweird.f32 %v211
    %vm218 = vmor %vm216, %vm217
    %v219 = vsel %vm218, %v211, %v215
    %v220 = vand.u32 2147483647, %v210
    %vm221 = vcmp.eq.f32.partialorder %v220, 8.507059e+37
    %v222 = vand.u32 %v210, 2147483648
    %v223 = vor.u32 1.1754944e-38, %v222
    %v224 = vsel %vm221, %v223, %v219
    %v225 = vmul.f32 1.0, %v224
    %v226 = vtanh.pop %v206
    %v227 = vmul.f32 %v225, %v170
    %229 = vrot.lane.b32.xlu0 %v226, 64
    %v230 = vpop.permute.xlu0 %229
    %v232 = vmul.f32 %v225, %v230
    %234 = vrot.lane.b32.xlu0 %v232, 32
    %v235 = vpop.permute.xlu0 %234
    %v237 = vadd.f32 %v227, %v235
    %v238 = vtanh.pop %v237
    %240 = vrot.lane.b32.xlu0 %v238, 64
    %v241 = vpop.permute.xlu0 %240
    %v243 = vmul.f32 %v225, %v241
    %245 = vrot.lane.b32.xlu0 %v243, 32
    %v246 = vpop.permute.xlu0 %245
    %248 = vst.msk [vmem:[#allocation3 + $0x2] sm:$0x3] %vm181, %v246
    %v249 = vld [vmem:[#allocation2 + $0x4] sm:$0x3]
    %v250 = vsel %vm111, %v246, 0
    %252 = vmatpush.msra.mxu0 0.0
    %253 = vmatpush.msra.mxu0 0.0
    %254 = vmatpush.msra.mxu0 0.0
    %255 = vmatpush.msra.mxu0 0.0
    %256 = vmatpush.msra.mxu0 0.0
    %257 = vmatpush.msra.mxu0 0.0
    %258 = vmatpush.msra.mxu0 0.0
    %259 = vmatpush.msra.mxu0 0.0
    %260 = vmatpush.msra.mxu0 0.0
    %261 = vmatpush.msra.mxu0 0.0
    %262 = vmatpush.msra.mxu0 0.0
    %263 = vmatpush.msra.mxu0 0.0
    %264 = vmatpush.msra.mxu0 %v107
    %265 = vmatpush.msra.mxu0 %v106
    %266 = vmatpush.msra.mxu0 %v105
    %267 = vmatpush.msra.mxu0 %v104
    %268 = vmatmul.f32.gmra.mxu0 %v250
    %v269 = vpop.f32.mrf.mxu0
    %v270 = vadd.f32 0.0, %v269
    %271 = vdwg.mxu0
    %v272 = vadd.f32 %v249, %v270
    %v273 = vxor.u32 %v272, 2147483648
    %v274 = vmul.f32 %v273, 1.442695
    %v275 = vpow.pop %v274
    %v276 = vadd.f32 %v275, 1.0
    %v277 = vrcp.pop %v276
    %v278 = vmul.f32 %v276, %v277
    %v279 = vsub.f32 1.0, %v278
    %v280 = vmul.f32 %v277, %v279
    %v281 = vadd.f32 %v277, %v280
    %vm282 = vweird.f32 %v276
    %vm283 = vweird.f32 %v277
    %vm284 = vmor %vm282, %vm283
    %v285 = vsel %vm284, %v277, %v281
    %v286 = vand.u32 2147483647, %v276
    %vm287 = vcmp.eq.f32.partialorder %v286, 8.507059e+37
    %v288 = vand.u32 %v276, 2147483648
    %v289 = vor.u32 1.1754944e-38, %v288
    %v290 = vsel %vm287, %v289, %v285
    %v291 = vmul.f32 1.0, %v290
    %v292 = vtanh.pop %v272
    %v293 = vmul.f32 %v291, %v237
    %295 = vrot.lane.b32.xlu0 %v292, 64
    %v296 = vpop.permute.xlu0 %295
    %v298 = vmul.f32 %v291, %v296
    %300 = vrot.lane.b32.xlu0 %v298, 32
    %v301 = vpop.permute.xlu0 %300
    %v303 = vadd.f32 %v293, %v301
    %v304 = vtanh.pop %v303
    %306 = vrot.lane.b32.xlu0 %v304, 64
    %v307 = vpop.permute.xlu0 %306
    %v309 = vmul.f32 %v291, %v307
    %311 = vrot.lane.b32.xlu0 %v309, 32
    %v312 = vpop.permute.xlu0 %311
    %314 = vst.msk [vmem:[#allocation3 + $0x4] sm:$0x3] %vm181, %v312
    %v315 = vld [vmem:[#allocation2 + $0x6] sm:$0x3]
    %v316 = vsel %vm111, %v312, 0
    %318 = vmatpush.msra.mxu0 0.0
    %319 = vmatpush.msra.mxu0 0.0
    %320 = vmatpush.msra.mxu0 0.0
    %321 = vmatpush.msra.mxu0 0.0
    %322 = vmatpush.msra.mxu0 0.0
    %323 = vmatpush.msra.mxu0 0.0
    %324 = vmatpush.msra.mxu0 0.0
    %325 = vmatpush.msra.mxu0 0.0
    %326 = vmatpush.msra.mxu0 0.0
    %327 = vmatpush.msra.mxu0 0.0
    %328 = vmatpush.msra.mxu0 0.0
    %329 = vmatpush.msra.mxu0 0.0
    %330 = vmatpush.msra.mxu0 %v107
    %331 = vmatpush.msra.mxu0 %v106
    %332 = vmatpush.msra.mxu0 %v105
    %333 = vmatpush.msra.mxu0 %v104
    %334 = vmatmul.f32.gmra.mxu0 %v316
    %v335 = vpop.f32.mrf.mxu0
    %v336 = vadd.f32 0.0, %v335
    %337 = vdwg.mxu0
    %v338 = vadd.f32 %v315, %v336
    %v339 = vxor.u32 %v338, 2147483648
    %v340 = vmul.f32 %v339, 1.442695
    %v341 = vpow.pop %v340
    %v342 = vadd.f32 %v341, 1.0
    %v343 = vrcp.pop %v342
    %v344 = vmul.f32 %v342, %v343
    %v345 = vsub.f32 1.0, %v344
    %v346 = vmul.f32 %v343, %v345
    %v347 = vadd.f32 %v343, %v346
    %vm348 = vweird.f32 %v342
    %vm349 = vweird.f32 %v343
    %vm350 = vmor %vm348, %vm349
    %v351 = vsel %vm350, %v343, %v347
    %v352 = vand.u32 2147483647, %v342
    %vm353 = vcmp.eq.f32.partialorder %v352, 8.507059e+37
    %v354 = vand.u32 %v342, 2147483648
    %v355 = vor.u32 1.1754944e-38, %v354
    %v356 = vsel %vm353, %v355, %v351
    %v357 = vmul.f32 1.0, %v356
    %v358 = vtanh.pop %v338
    %v359 = vmul.f32 %v357, %v303
    %361 = vrot.lane.b32.xlu0 %v358, 64
    %v362 = vpop.permute.xlu0 %361
    %v364 = vmul.f32 %v357, %v362
    %366 = vrot.lane.b32.xlu0 %v364, 32
    %v367 = vpop.permute.xlu0 %366
    %v369 = vadd.f32 %v359, %v367
    %v370 = vtanh.pop %v369
    %372 = vrot.lane.b32.xlu0 %v370, 64
    %v373 = vpop.permute.xlu0 %372
    %v375 = vmul.f32 %v357, %v373
    %377 = vrot.lane.b32.xlu0 %v375, 32
    %v378 = vpop.permute.xlu0 %377
    %380 = vst.msk [vmem:[#allocation3 + $0x6] sm:$0x3] %vm181, %v378
    %v381 = vld [vmem:[#allocation2 + $0x8] sm:$0x3]
    %v382 = vsel %vm111, %v378, 0
    %384 = vmatpush.msra.mxu0 0.0
    %385 = vmatpush.msra.mxu0 0.0
    %386 = vmatpush.msra.mxu0 0.0
    %387 = vmatpush.msra.mxu0 0.0
    %388 = vmatpush.msra.mxu0 0.0
    %389 = vmatpush.msra.mxu0 0.0
    %390 = vmatpush.msra.mxu0 0.0
    %391 = vmatpush.msra.mxu0 0.0
    %392 = vmatpush.msra.mxu0 0.0
    %393 = vmatpush.msra.mxu0 0.0
    %394 = vmatpush.msra.mxu0 0.0
    %395 = vmatpush.msra.mxu0 0.0
    %396 = vmatpush.msra.mxu0 %v107
    %397 = vmatpush.msra.mxu0 %v106
    %398 = vmatpush.msra.mxu0 %v105
    %399 = vmatpush.msra.mxu0 %v104
    %400 = vmatmul.f32.gmra.mxu0 %v382
    %v401 = vpop.f32.mrf.mxu0
    %v402 = vadd.f32 0.0, %v401
    %403 = vdwg.mxu0
    %v404 = vadd.f32 %v381, %v402
    %v405 = vxor.u32 %v404, 2147483648
    %v406 = vmul.f32 %v405, 1.442695
    %v407 = vpow.pop %v406
    %v408 = vadd.f32 %v407, 1.0
    %v409 = vrcp.pop %v408
    %v410 = vmul.f32 %v408, %v409
    %v411 = vsub.f32 1.0, %v410
    %v412 = vmul.f32 %v409, %v411
    %v413 = vadd.f32 %v409, %v412
    %vm414 = vweird.f32 %v408
    %vm415 = vweird.f32 %v409
    %vm416 = vmor %vm414, %vm415
    %v417 = vsel %vm416, %v409, %v413
    %v418 = vand.u32 2147483647, %v408
    %vm419 = vcmp.eq.f32.partialorder %v418, 8.507059e+37
    %v420 = vand.u32 %v408, 2147483648
    %v421 = vor.u32 1.1754944e-38, %v420
    %v422 = vsel %vm419, %v421, %v417
    %v423 = vmul.f32 1.0, %v422
    %v424 = vtanh.pop %v404
    %v425 = vmul.f32 %v423, %v369
    %427 = vrot.lane.b32.xlu0 %v424, 64
    %v428 = vpop.permute.xlu0 %427
    %v430 = vmul.f32 %v423, %v428
    %432 = vrot.lane.b32.xlu0 %v430, 32
    %v433 = vpop.permute.xlu0 %432
    %v435 = vadd.f32 %v425, %v433
    %v436 = vtanh.pop %v435
    %438 = vrot.lane.b32.xlu0 %v436, 64
    %v439 = vpop.permute.xlu0 %438
    %v441 = vmul.f32 %v423, %v439
    %443 = vrot.lane.b32.xlu0 %v441, 32
    %v444 = vpop.permute.xlu0 %443
    %446 = vst.msk [vmem:[#allocation3 + $0x8] sm:$0x3] %vm181, %v444
    %v447 = vld [vmem:[#allocation2 + $0xa] sm:$0x3]
    %v448 = vsel %vm111, %v444, 0
    %450 = vmatpush.msra.mxu0 0.0
    %451 = vmatpush.msra.mxu0 0.0
    %452 = vmatpush.msra.mxu0 0.0
    %453 = vmatpush.msra.mxu0 0.0
    %454 = vmatpush.msra.mxu0 0.0
    %455 = vmatpush.msra.mxu0 0.0
    %456 = vmatpush.msra.mxu0 0.0
    %457 = vmatpush.msra.mxu0 0.0
    %458 = vmatpush.msra.mxu0 0.0
    %459 = vmatpush.msra.mxu0 0.0
    %460 = vmatpush.msra.mxu0 0.0
    %461 = vmatpush.msra.mxu0 0.0
    %462 = vmatpush.msra.mxu0 %v107
    %463 = vmatpush.msra.mxu0 %v106
    %464 = vmatpush.msra.mxu0 %v105
    %465 = vmatpush.msra.mxu0 %v104
    %466 = vmatmul.f32.gmra.mxu0 %v448
    %v467 = vpop.f32.mrf.mxu0
    %v468 = vadd.f32 0.0, %v467
    %469 = vdwg.mxu0
    %v470 = vadd.f32 %v447, %v468
    %v471 = vxor.u32 %v470, 2147483648
    %v472 = vmul.f32 %v471, 1.442695
    %v473 = vpow.pop %v472
    %v474 = vadd.f32 %v473, 1.0
    %v475 = vrcp.pop %v474
    %v476 = vmul.f32 %v474, %v475
    %v477 = vsub.f32 1.0, %v476
    %v478 = vmul.f32 %v475, %v477
    %v479 = vadd.f32 %v475, %v478
    %vm480 = vweird.f32 %v474
    %vm481 = vweird.f32 %v475
    %vm482 = vmor %vm480, %vm481
    %v483 = vsel %vm482, %v475, %v479
    %v484 = vand.u32 2147483647, %v474
    %vm485 = vcmp.eq.f32.partialorder %v484, 8.507059e+37
    %v486 = vand.u32 %v474, 2147483648
    %v487 = vor.u32 1.1754944e-38, %v486
    %v488 = vsel %vm485, %v487, %v483
    %v489 = vmul.f32 1.0, %v488
    %v490 = vtanh.pop %v470
    %v491 = vmul.f32 %v489, %v435
    %493 = vrot.lane.b32.xlu0 %v490, 64
    %v494 = vpop.permute.xlu0 %493
    %v496 = vmul.f32 %v489, %v494
    %498 = vrot.lane.b32.xlu0 %v496, 32
    %v499 = vpop.permute.xlu0 %498
    %v501 = vadd.f32 %v491, %v499
    %v502 = vtanh.pop %v501
    %504 = vrot.lane.b32.xlu0 %v502, 64
    %v505 = vpop.permute.xlu0 %504
    %v507 = vmul.f32 %v489, %v505
    %509 = vrot.lane.b32.xlu0 %v507, 32
    %v510 = vpop.permute.xlu0 %509
    %512 = vst.msk [vmem:[#allocation3 + $0xa] sm:$0x3] %vm181, %v510
    %v513 = vld [vmem:[#allocation2 + $0xc] sm:$0x3]
    %v514 = vsel %vm111, %v510, 0
    %516 = vmatpush.msra.mxu0 0.0
    %517 = vmatpush.msra.mxu0 0.0
    %518 = vmatpush.msra.mxu0 0.0
    %519 = vmatpush.msra.mxu0 0.0
    %520 = vmatpush.msra.mxu0 0.0
    %521 = vmatpush.msra.mxu0 0.0
    %522 = vmatpush.msra.mxu0 0.0
    %523 = vmatpush.msra.mxu0 0.0
    %524 = vmatpush.msra.mxu0 0.0
    %525 = vmatpush.msra.mxu0 0.0
    %526 = vmatpush.msra.mxu0 0.0
    %527 = vmatpush.msra.mxu0 0.0
    %528 = vmatpush.msra.mxu0 %v107
    %529 = vmatpush.msra.mxu0 %v106
    %530 = vmatpush.msra.mxu0 %v105
    %531 = vmatpush.msra.mxu0 %v104
    %532 = vmatmul.f32.gmra.mxu0 %v514
    %v533 = vpop.f32.mrf.mxu0
    %v534 = vadd.f32 0.0, %v533
    %535 = vdwg.mxu0
    %v536 = vadd.f32 %v513, %v534
    %v537 = vxor.u32 %v536, 2147483648
    %v538 = vmul.f32 %v537, 1.442695
    %v539 = vpow.pop %v538
    %v540 = vadd.f32 %v539, 1.0
    %v541 = vrcp.pop %v540
    %v542 = vmul.f32 %v540, %v541
    %v543 = vsub.f32 1.0, %v542
    %v544 = vmul.f32 %v541, %v543
    %v545 = vadd.f32 %v541, %v544
    %vm546 = vweird.f32 %v540
    %vm547 = vweird.f32 %v541
    %vm548 = vmor %vm546, %vm547
    %v549 = vsel %vm548, %v541, %v545
    %v550 = vand.u32 2147483647, %v540
    %vm551 = vcmp.eq.f32.partialorder %v550, 8.507059e+37
    %v552 = vand.u32 %v540, 2147483648
    %v553 = vor.u32 1.1754944e-38, %v552
    %v554 = vsel %vm551, %v553, %v549
    %v555 = vmul.f32 1.0, %v554
    %v556 = vtanh.pop %v536
    %v557 = vmul.f32 %v555, %v501
    %559 = vrot.lane.b32.xlu0 %v556, 64
    %v560 = vpop.permute.xlu0 %559
    %v562 = vmul.f32 %v555, %v560
    %564 = vrot.lane.b32.xlu0 %v562, 32
    %v565 = vpop.permute.xlu0 %564
    %v567 = vadd.f32 %v557, %v565
    %v568 = vtanh.pop %v567
    %570 = vrot.lane.b32.xlu0 %v568, 64
    %v571 = vpop.permute.xlu0 %570
    %v573 = vmul.f32 %v555, %v571
    %575 = vrot.lane.b32.xlu0 %v573, 32
    %v576 = vpop.permute.xlu0 %575
    %578 = vst.msk [vmem:[#allocation3 + $0xc] sm:$0x3] %vm181, %v576
    %v579 = vld [vmem:[#allocation2 + $0xe] sm:$0x3]
    %v580 = vsel %vm111, %v576, 0
    %582 = vmatpush.msra.mxu0 0.0
    %583 = vmatpush.msra.mxu0 0.0
    %584 = vmatpush.msra.mxu0 0.0
    %585 = vmatpush.msra.mxu0 0.0
    %586 = vmatpush.msra.mxu0 0.0
    %587 = vmatpush.msra.mxu0 0.0
    %588 = vmatpush.msra.mxu0 0.0
    %589 = vmatpush.msra.mxu0 0.0
    %590 = vmatpush.msra.mxu0 0.0
    %591 = vmatpush.msra.mxu0 0.0
    %592 = vmatpush.msra.mxu0 0.0
    %593 = vmatpush.msra.mxu0 0.0
    %594 = vmatpush.msra.mxu0 %v107
    %595 = vmatpush.msra.mxu0 %v106
    %596 = vmatpush.msra.mxu0 %v105
    %597 = vmatpush.msra.mxu0 %v104
    %598 = vmatmul.f32.gmra.mxu0 %v580
    %v599 = vpop.f32.mrf.mxu0
    %v600 = vadd.f32 0.0, %v599
    %601 = vdwg.mxu0
    %v602 = vadd.f32 %v579, %v600
    %v603 = vxor.u32 %v602, 2147483648
    %v604 = vmul.f32 %v603, 1.442695
    %v605 = vpow.pop %v604
    %v606 = vadd.f32 %v605, 1.0
    %v607 = vrcp.pop %v606
    %v608 = vmul.f32 %v606, %v607
    %v609 = vsub.f32 1.0, %v608
    %v610 = vmul.f32 %v607, %v609
    %v611 = vadd.f32 %v607, %v610
    %vm612 = vweird.f32 %v606
    %vm613 = vweird.f32 %v607
    %vm614 = vmor %vm612, %vm613
    %v615 = vsel %vm614, %v607, %v611
    %v616 = vand.u32 2147483647, %v606
    %vm617 = vcmp.eq.f32.partialorder %v616, 8.507059e+37
    %v618 = vand.u32 %v606, 2147483648
    %v619 = vor.u32 1.1754944e-38, %v618
    %v620 = vsel %vm617, %v619, %v615
    %v621 = vmul.f32 1.0, %v620
    %v622 = vtanh.pop %v602
    %v623 = vmul.f32 %v621, %v567
    %625 = vrot.lane.b32.xlu0 %v622, 64
    %v626 = vpop.permute.xlu0 %625
    %v628 = vmul.f32 %v621, %v626
    %630 = vrot.lane.b32.xlu0 %v628, 32
    %v631 = vpop.permute.xlu0 %630
    %v633 = vadd.f32 %v623, %v631
    %v634 = vtanh.pop %v633
    %636 = vrot.lane.b32.xlu0 %v634, 64
    %v637 = vpop.permute.xlu0 %636
    %v639 = vmul.f32 %v621, %v637
    %641 = vrot.lane.b32.xlu0 %v639, 32
    %v642 = vpop.permute.xlu0 %641
    %644 = vst.msk [vmem:[#allocation3 + $0xe] sm:$0x3] %vm181, %v642
    %645 = vst.msk [vmem:[#allocation10] sm:$0x3] %vm181, %v642
    %647 = vrot.lane.b32.xlu0 %v633, 96
    %v648 = vpop.permute.xlu0 %647
    %650 = vst.msk [vmem:[#allocation12] sm:$0x3] %vm181, %v648
    %v651 = vld [vmem:[#allocation3] sm:$0xff]
    %v652 = vld [vmem:[#allocation3 + $0x8] sm:$0xff]
    %v653 = vld [vmem:[%s6] sm:$0xff]
    %v654 = vld [vmem:[%s6 + $0x8] sm:$0xff]
    %v655 = vld [vmem:[%s6 + $0x10] sm:$0xff]
    %v656 = vld [vmem:[%s6 + $0x18] sm:$0xff]
    %v657 = vld [vmem:[%s7] sm:$0x1]
    %v659 = vperm.slane %v657, 0
    %v662 = vsel %vm111, %v651, 0
    %v665 = vsel %vm111, %v652, 0
    %667 = vmatpush.msra.mxu0 0.0
    %668 = vmatpush.msra.mxu0 0.0
    %669 = vmatpush.msra.mxu0 0.0
    %670 = vmatpush.msra.mxu0 0.0
    %671 = vmatpush.msra.mxu0 0.0
    %672 = vmatpush.msra.mxu0 0.0
    %673 = vmatpush.msra.mxu0 0.0
    %674 = vmatpush.msra.mxu0 0.0
    %675 = vmatpush.msra.mxu0 0.0
    %676 = vmatpush.msra.mxu0 0.0
    %677 = vmatpush.msra.mxu0 0.0
    %678 = vmatpush.msra.mxu0 0.0
    %679 = vmatpush.msra.mxu0 %v656
    %680 = vmatpush.msra.mxu0 %v655
    %681 = vmatpush.msra.mxu0 %v654
    %682 = vmatpush.msra.mxu0 %v653
    %683 = vmatmul.f32.gmra.mxu0 %v662
    %v684 = vpop.f32.mrf.mxu0
    %v685 = vadd.f32 %v659, %v684
    %686 = vmatmul.f32.gmra.mxu0 %v665
    %v687 = vpop.f32.mrf.mxu0
    %v688 = vadd.f32 %v659, %v687
    %689 = vdwg.mxu0
    %690 = vst.msk [vmem:[#allocation9] sm:$0xff] %vm72, %v685
    %691 = vst.msk [vmem:[#allocation9 + $0x8] sm:$0xff] %vm72, %v688
    // Predicated region
    $region42: #{tpu_custom_call.1} parent=1 // pred_check
      _
    $region43: #{tpu_custom_call.1} parent=1 // pred_check_branch
      %693 = sbr.rel (0) target = $region45
    $region44: #{tpu_custom_call.1} parent=1 // pred_region
      %695 = vsyncadd [#allocation6], 0
      %s696 = sshll.u32 [#allocation9], 4
      %s697 = int_to_ptr.vmem [resolvable:$true] %s696
      %s698 = sshll.u32 %s8, 4
      %s699 = int_to_ptr.hbm [resolvable:$true] %s698
      %704 = dma.vmem_to_hbm [thread:$0]  %s697, 256, %s699, [#allocation6], 128, 128, 8
    $region45: #{tpu_custom_call.1} parent=1 // pred_fallthru
      _
    // Predicated region
    $region46: #{tpu_custom_call.1} parent=1 // pred_check
      _
    $region47: #{tpu_custom_call.1} parent=1 // pred_check_branch
      %706 = sbr.rel (0) target = $region49
    $region48: #{tpu_custom_call.1} parent=1 // pred_region
      %708 = vsyncadd [#allocation11], 0
      %s710 = sshll.u32 [#allocation10], 4
      %s711 = int_to_ptr.vmem [resolvable:$true] %s710
      %s712 = sshll.u32 %s9, 4
      %s713 = int_to_ptr.hbm [resolvable:$true] %s712
      %715 = dma.vmem_to_hbm [thread:$0]  %s711, 32, %s713, [#allocation11]
    $region49: #{tpu_custom_call.1} parent=1 // pred_fallthru
      _
    // Predicated region
    $region50: #{tpu_custom_call.1} parent=1 // pred_check
      _
    $region51: #{tpu_custom_call.1} parent=1 // pred_check_branch
      %717 = sbr.rel (0) target = $region53
    $region52: #{tpu_custom_call.1} parent=1 // pred_region
      %719 = vsyncadd [#allocation11], 0
      %s721 = sshll.u32 [#allocation12], 4
      %s722 = int_to_ptr.vmem [resolvable:$true] %s721
      %s723 = sshll.u32 %s10, 4
      %s724 = int_to_ptr.hbm [resolvable:$true] %s723
      %726 = dma.vmem_to_hbm [thread:$0]  %s722, 32, %s724, [#allocation11]
    $region53: #{tpu_custom_call.1} parent=1 // pred_fallthru
      _
    // Predicated region
    $region54: #{tpu_custom_call.1} parent=1 // pred_check
      _
    $region55: #{tpu_custom_call.1} parent=1 // pred_check_branch
      %728 = sbr.rel (0) target = $region57
    $region56: #{tpu_custom_call.1} parent=1 // pred_region
      %730 = dma.done [#allocation6], 256
    $region57: #{tpu_custom_call.1} parent=1 // pred_fallthru
      _
    // Predicated region
    $region58: #{tpu_custom_call.1} parent=1 // pred_check
      _
    $region59: #{tpu_custom_call.1} parent=1 // pred_check_branch
      %732 = sbr.rel (0) target = $region61
    $region60: #{tpu_custom_call.1} parent=1 // pred_region
      %734 = dma.done [#allocation11], 32
    $region61: #{tpu_custom_call.1} parent=1 // pred_fallthru
      _
    // Predicated region
    $region62: #{tpu_custom_call.1} parent=1 // pred_check
      _
    $region63: #{tpu_custom_call.1} parent=1 // pred_check_branch
      %736 = sbr.rel (0) target = $region65
    $region64: #{tpu_custom_call.1} parent=1 // pred_region
      %738 = dma.done [#allocation11], 32
    $region65: #{tpu_custom_call.1} parent=1 // pred_fallthru
      _
    %739 = vsyncpa [#allocation5], 1
    %740 = vsyncpa [#allocation8], 1
    %741 = vsyncpa [#allocation6], 1
    %742 = vsyncpa [#allocation11], 1

</llo_original>
